<compile_context>
chip_gen: v5e
topology: v5e:2x2
jax: 0.10.0
libtpu: 0.0.40
codegen_flags: <defaults>
</compile_context>

<pallas_src>
import jax
import jax.numpy as jnp
from jax.experimental import pallas as pl
from jax.experimental.pallas import tpu as pltpu


def _gate_fuse_kernel(g_ref, f1_ref, f2_ref, o_ref):
    # g_ref: (1, W) f32 gate (resident across all grid steps: index_map is constant)
    # f1_ref/f2_ref/o_ref: (TR, W) tiles of the flattened feature arrays.
    g = g_ref[...]                                   # (1, W), broadcasts over rows
    f1 = f1_ref[...].astype(jnp.float32)
    f2 = f2_ref[...].astype(jnp.float32)
    o_ref[...] = (f1 * g + f2 * (1.0 - g)).astype(o_ref.dtype)


def _choose_lane_width(total_elems, D):
    """Pick a lane width W (multiple of D) so the gate tiles cleanly and the
    last dim is lane-dense (multiple of 128) whenever the shape allows."""
    if D % 128 == 0:
        return D                                     # already lane-dense
    if 128 % D == 0 and total_elems % 128 == 0:
        return 128                                   # fold (128 // D) positions per row
    return D                                         # lane-sparse fallback, still correct


def _choose_row_tile(R, W, itemsize, target_bytes=2 * 1024 * 1024):
    """~2 MiB per tile buffer; multiple of 8 rows unless taking the full extent."""
    tr = target_bytes // max(1, W * itemsize)
    tr = int(tr) - int(tr) % 8
    if tr <= 0:
        tr = 8
    if tr >= R:
        return R                                     # full extent is always legal
    return tr


def _fuse_one_layer(f1, f2, gate_lane_f32, W):
    """f1, f2: [B, T, D] (same shape/dtype). gate_lane_f32: [1, W] f32."""
    orig_shape = f1.shape
    total = f1.size
    R = total // W
    x1 = f1.reshape(R, W)                            # free: contiguous reshape
    x2 = f2.reshape(R, W)
    TR = _choose_row_tile(R, W, f1.dtype.itemsize)
    grid = (pl.cdiv(R, TR),)

    out = pl.pallas_call(
        _gate_fuse_kernel,
        out_shape=jax.ShapeDtypeStruct((R, W), f1.dtype),
        grid_spec=pltpu.PrefetchScalarGridSpec(
            num_scalar_prefetch=0,
            grid=grid,
            in_specs=[
                pl.BlockSpec((1, W), lambda i: (0, 0)),      # gate, stays resident
                pl.BlockSpec((TR, W), lambda i: (i, 0)),
                pl.BlockSpec((TR, W), lambda i: (i, 0)),
            ],
            out_specs=pl.BlockSpec((TR, W), lambda i: (i, 0)),
        ),
        compiler_params=pltpu.CompilerParams(
            dimension_semantics=("parallel",)
        ),
    )(gate_lane_f32, x1, x2)
    return out.reshape(orig_shape)


class GateDimFusionerPallas:
    """JAX/Pallas mirror of s3prl's gate_dim fusioner."""

    def __init__(self, featurizer1, featurizer2, init_value=1.5):
        assert featurizer1["output_dim"] == featurizer2["output_dim"]
        self.upstream_dim = featurizer1["output_dim"]
        assert featurizer1["downsample_rate"] == featurizer2["downsample_rate"]
        self.downsample_rate = featurizer1["downsample_rate"]
        self.trainable = True
        # nn.Parameter equivalent: a plain jnp array filled with init_value.
        self.gate_values = jnp.full((self.upstream_dim,), init_value, dtype=jnp.float32)
        self.showinfo()

    def showinfo(self):
        print(f"[Fusioner] - Name: {self.__class__.__name__}")
        print(f"[Fusioner] - Upstream dim: {self.upstream_dim}")
        print(f"[Fusioner] - Downsample rate: {self.downsample_rate}")

    def _get_gate(self):
        return jax.nn.sigmoid(self.gate_values)

    def show(self):
        gates = self._get_gate()
        dim1_count = int(jnp.sum(gates > 0.7))
        dim2_count = int(jnp.sum(gates < 0.3))
        both_count = self.upstream_dim - dim1_count - dim2_count
        print(f"[Fusioner] - Gate: {dim1_count} dim1, {dim2_count} dim2, {both_count} both")

    def forward(self, features1, features2):
        # features1 / features2: lists of [B, T, D] arrays (one per layer).
        assert len(features1) == len(features2)
        D = self.upstream_dim
        gates = self._get_gate()                                   # [D], f32

        outs = []
        for f1, f2 in zip(features1, features2):
            assert f1.shape == f2.shape and f1.shape[-1] == D
            W = _choose_lane_width(f1.size, D)
            # Tile the [D] gate across the lane width so rows of the flattened
            # [R, W] view see the correct per-feature gate.
            gate_lane = jnp.tile(gates, W // D).reshape(1, W).astype(jnp.float32)
            outs.append(_fuse_one_layer(f1, f2, gate_lane, W))
        return outs


if __name__ == "__main__":
    # Synthetic featurizer descriptors (deterministic, no checkpoint loading).
    featurizer1 = {"output_dim": 32, "downsample_rate": 320}
    featurizer2 = {"output_dim": 32, "downsample_rate": 320}
    fusioner = GateDimFusionerPallas(featurizer1, featurizer2, init_value=1.5)

    # Small deterministic inputs: L=3 layers of [B=2, T=8, D=32] features.
    key = jax.random.PRNGKey(0)
    L, B, T, D = 3, 2, 8, 32
    k1, k2 = jax.random.split(key)
    f1_all = jax.random.normal(k1, (L, B, T, D), dtype=jnp.float32)
    f2_all = jax.random.normal(k2, (L, B, T, D), dtype=jnp.float32)
    feats1 = [f1_all[l] for l in range(L)]
    feats2 = [f2_all[l] for l in range(L)]

    out = fusioner.forward(feats1, feats2)
    out = [jax.block_until_ready(o) for o in out]

    # Cross-check against plain-JAX reference of gate_dim.forward.
    g = jax.nn.sigmoid(jnp.full((D,), 1.5, dtype=jnp.float32))
    for o, a, b in zip(out, feats1, feats2):
        ref = a * g + b * (1.0 - g)
        assert o.shape == a.shape
        assert jnp.allclose(o, ref, atol=1e-5), "mismatch vs reference"

    print("KERNEL_OK")
</pallas_src>

<mosaic_0001>
module attributes {stable_mosaic.version = 11 : i64} {
  func.func @_gate_fuse_kernel(%arg0: i32, %arg1: memref<1x128xf32, #tpu.memory_space<vmem>>, %arg2: memref<4x128xf32, #tpu.memory_space<vmem>>, %arg3: memref<4x128xf32, #tpu.memory_space<vmem>>, %arg4: memref<4x128xf32, #tpu.memory_space<vmem>>) attributes {dimension_semantics = [#tpu.dimension_semantics<parallel>], iteration_bounds = array<i64: 1>, scalar_prefetch = 0 : i64, scratch_operands = 0 : i64, tpu.core_type = #tpu.core_type<tc>, window_params = [{pipeline_mode = #tpu.pipeline_mode<synchronous>, transform_indices = @transform_0, window_bounds = array<i64: 1, 128>}, {transform_indices = @transform_1, window_bounds = array<i64: 4, 128>}, {transform_indices = @transform_2, window_bounds = array<i64: 4, 128>}, {transform_indices = @transform_3, window_bounds = array<i64: 4, 128>}]} {
    %c0 = arith.constant 0 : index
    %c0_0 = arith.constant 0 : index
    %0 = vector.load %arg1[%c0, %c0_0] : memref<1x128xf32, #tpu.memory_space<vmem>>, vector<1x128xf32>
    %c0_1 = arith.constant 0 : index
    %c0_2 = arith.constant 0 : index
    %1 = vector.load %arg2[%c0_1, %c0_2] : memref<4x128xf32, #tpu.memory_space<vmem>>, vector<4x128xf32>
    %c0_3 = arith.constant 0 : index
    %c0_4 = arith.constant 0 : index
    %2 = vector.load %arg3[%c0_3, %c0_4] : memref<4x128xf32, #tpu.memory_space<vmem>>, vector<4x128xf32>
    %3 = vector.broadcast %0 : vector<1x128xf32> to vector<4x128xf32>
    %4 = arith.mulf %1, %3 : vector<4x128xf32>
    %cst = arith.constant 1.000000e+00 : f32
    %5 = vector.broadcast %cst : f32 to vector<1x128xf32>
    %6 = arith.subf %5, %0 : vector<1x128xf32>
    %7 = vector.broadcast %6 : vector<1x128xf32> to vector<4x128xf32>
    %8 = arith.mulf %2, %7 : vector<4x128xf32>
    %9 = arith.addf %4, %8 : vector<4x128xf32>
    %c0_5 = arith.constant 0 : index
    %c0_6 = arith.constant 0 : index
    %10 = vector.load %arg4[%c0_5, %c0_6] : memref<4x128xf32, #tpu.memory_space<vmem>>, vector<4x128xf32>
    tpu.vector_store %arg4[%c0_5, %c0_6], %9 {strides = array<i32>} : memref<4x128xf32, #tpu.memory_space<vmem>>, vector<4x128xf32>,
    return
  }
  func.func @transform_0(%arg0: i32) -> (i32, i32) {
    %c0_i32 = arith.constant 0 : i32
    %c0_i32_0 = arith.constant 0 : i32
    %c0_i32_1 = arith.constant 0 : i32
    return %c0_i32, %c0_i32_0 : i32, i32
  }
  func.func @transform_1(%arg0: i32) -> (i32, i32) {
    %c0_i32 = arith.constant 0 : i32
    %c0_i32_0 = arith.constant 0 : i32
    return %arg0, %c0_i32 : i32, i32
  }
  func.func @transform_2(%arg0: i32) -> (i32, i32) {
    %c0_i32 = arith.constant 0 : i32
    %c0_i32_0 = arith.constant 0 : i32
    return %arg0, %c0_i32 : i32, i32
  }
  func.func @transform_3(%arg0: i32) -> (i32, i32) {
    %c0_i32 = arith.constant 0 : i32
    %c0_i32_0 = arith.constant 0 : i32
    return %arg0, %c0_i32 : i32, i32
  }
}

</mosaic_0001>

<llo_original>
// kernel: tpu_custom_call.1
$region0: #{tpu_custom_call.1}
  #allocation0 [shape = 'u32[]', space=smem, size = 0x4, offset = 0x4, fixed_abs, tag = 'smem constant byte address 0x4 - core index']
  #allocation1 [shape = 'u32[72,128]{1,0:T(1,128)}', space=vmem, size = 0x9000, scoped, tag = 'internal scratch']
  %s0 = inlined_call_operand.hbm [shape: f32[1,128], index: 0, kind: input, shape index: {}]
  %s1 = inlined_call_operand.hbm [shape: f32[4,128], index: 1, kind: input, shape index: {}]
  %s2 = inlined_call_operand.hbm [shape: f32[4,128], index: 2, kind: input, shape index: {}]
  %s3 = inlined_call_operand.hbm [shape: f32[4,128], index: 3, kind: output, shape index: {}]
  %s4 = sld [smem:[#allocation0]]
  $region34: #{tpu_custom_call.1} parent=0
    _
  %s6 = ssub.s32 1, %s4
  %s7 = scalar_select 0, %s6, %s4
  $region1: #{tpu_custom_call.1} parent=0
    #allocation2 [shape = 'u8[512]{0}', space=vmem, size = 0x400, scoped, tag = 'input window, operand 0, single buffered']
    #allocation3 [shape = 's32[1]{0}', space=sflag, size = 0x4, scoped, tag = 'scoped memory for tpu_custom_call.1']
    #allocation4 [shape = 's32[1]{0}', space=sflag, size = 0x4, scoped, tag = 'scoped memory for tpu_custom_call.1']
    #allocation5 [shape = 'u8[2048]{0}', space=vmem, size = 0x800, scoped, tag = 'input window, operand 1, single buffered']
    #allocation6 [shape = 's32[1]{0}', space=sflag, size = 0x4, scoped, tag = 'scoped memory for tpu_custom_call.1']
    #allocation7 [shape = 'u8[2048]{0}', space=vmem, size = 0x800, scoped, tag = 'input window, operand 2, single buffered']
    #allocation8 [shape = 'u8[2048]{0}', space=vmem, size = 0x800, scoped, tag = 'output window, operand 0, single buffered']
    %8 = vsyncpa [#allocation3], 0
    %9 = vsyncpa [#allocation6], 0
    %10 = vsyncpa [#allocation4], 0
    // Predicated region
    $region2: #{tpu_custom_call.1} parent=1 // pred_check
      _
    $region3: #{tpu_custom_call.1} parent=1 // pred_check_branch
      %12 = sbr.rel (0) target = $region5
    $region4: #{tpu_custom_call.1} parent=1 // pred_region
      %14 = vsyncadd [#allocation3], 0
      %s16 = sshll.u32 %s0, 4
      %s17 = int_to_ptr.hbm [resolvable:$true] %s16
      %s18 = sshll.u32 [#allocation2], 4
      %s19 = int_to_ptr.vmem [resolvable:$true] %s18
      %21 = dma.hbm_to_vmem [thread:$0]  %s17, 16, %s19, [#allocation3]
    $region5: #{tpu_custom_call.1} parent=1 // pred_fallthru
      _
    // Predicated region
    $region6: #{tpu_custom_call.1} parent=1 // pred_check
      _
    $region7: #{tpu_custom_call.1} parent=1 // pred_check_branch
      %23 = sbr.rel (0) target = $region9
    $region8: #{tpu_custom_call.1} parent=1 // pred_region
      %25 = vsyncadd [#allocation6], 0
      %s27 = sshll.u32 %s1, 4
      %s28 = int_to_ptr.hbm [resolvable:$true] %s27
      %s29 = sshll.u32 [#allocation5], 4
      %s30 = int_to_ptr.vmem [resolvable:$true] %s29
      %32 = dma.hbm_to_vmem [thread:$0]  %s28, 64, %s30, [#allocation6]
    $region9: #{tpu_custom_call.1} parent=1 // pred_fallthru
      _
    // Predicated region
    $region10: #{tpu_custom_call.1} parent=1 // pred_check
      _
    $region11: #{tpu_custom_call.1} parent=1 // pred_check_branch
      %34 = sbr.rel (0) target = $region13
    $region12: #{tpu_custom_call.1} parent=1 // pred_region
      %36 = vsyncadd [#allocation6], 0
      %s38 = sshll.u32 %s2, 4
      %s39 = int_to_ptr.hbm [resolvable:$true] %s38
      %s40 = sshll.u32 [#allocation7], 4
      %s41 = int_to_ptr.vmem [resolvable:$true] %s40
      %43 = dma.hbm_to_vmem [thread:$0]  %s39, 64, %s41, [#allocation6]
    $region13: #{tpu_custom_call.1} parent=1 // pred_fallthru
      _
    // Predicated region
    $region14: #{tpu_custom_call.1} parent=1 // pred_check
      _
    $region15: #{tpu_custom_call.1} parent=1 // pred_check_branch
      %45 = sbr.rel (0) target = $region17
    $region16: #{tpu_custom_call.1} parent=1 // pred_region
      %47 = dma.done [#allocation3], 16
    $region17: #{tpu_custom_call.1} parent=1 // pred_fallthru
      _
    // Predicated region
    $region18: #{tpu_custom_call.1} parent=1 // pred_check
      _
    $region19: #{tpu_custom_call.1} parent=1 // pred_check_branch
      %49 = sbr.rel (0) target = $region21
    $region20: #{tpu_custom_call.1} parent=1 // pred_region
      %51 = dma.done [#allocation6], 64
    $region21: #{tpu_custom_call.1} parent=1 // pred_fallthru
      _
    // Predicated region
    $region22: #{tpu_custom_call.1} parent=1 // pred_check
      _
    $region23: #{tpu_custom_call.1} parent=1 // pred_check_branch
      %53 = sbr.rel (0) target = $region25
    $region24: #{tpu_custom_call.1} parent=1 // pred_region
      %55 = dma.done [#allocation6], 64
    $region25: #{tpu_custom_call.1} parent=1 // pred_fallthru
      _
    %v56 = vld [vmem:[#allocation2] sm:$0x1]
    %v57 = vld [vmem:[#allocation5] sm:$0xf]
    %v58 = vld [vmem:[#allocation7] sm:$0xf]
    %v60 = vperm.slane %v56, 0
    %v62 = vmul.f32 %v57, %v60
    %v63 = vsub.f32 1.0, %v56
    %v65 = vperm.slane %v63, 0
    %v67 = vmul.f32 %v58, %v65
    %v68 = vadd.f32 %v62, %v67
    %69 = vst [vmem:[#allocation8] sm:$0xf] %v68
    // Predicated region
    $region26: #{tpu_custom_call.1} parent=1 // pred_check
      _
    $region27: #{tpu_custom_call.1} parent=1 // pred_check_branch
      %71 = sbr.rel (0) target = $region29
    $region28: #{tpu_custom_call.1} parent=1 // pred_region
      %73 = vsyncadd [#allocation4], 0
      %s75 = sshll.u32 [#allocation8], 4
      %s76 = int_to_ptr.vmem [resolvable:$true] %s75
      %s77 = sshll.u32 %s3, 4
      %s78 = int_to_ptr.hbm [resolvable:$true] %s77
      %80 = dma.vmem_to_hbm [thread:$0]  %s76, 64, %s78, [#allocation4]
    $region29: #{tpu_custom_call.1} parent=1 // pred_fallthru
      _
    // Predicated region
    $region30: #{tpu_custom_call.1} parent=1 // pred_check
      _
    $region31: #{tpu_custom_call.1} parent=1 // pred_check_branch
      %82 = sbr.rel (0) target = $region33
    $region32: #{tpu_custom_call.1} parent=1 // pred_region
      %84 = dma.done [#allocation4], 64
    $region33: #{tpu_custom_call.1} parent=1 // pred_fallthru
      _
    %85 = vsyncpa [#allocation3], 1
    %86 = vsyncpa [#allocation6], 1
    %87 = vsyncpa [#allocation4], 1

</llo_original>
